<compile_context>
chip_gen: v7x
topology: tpu7x:2x2x1
jax: 0.10.0
libtpu: 0.0.40
codegen_flags: <defaults>
</compile_context>

<pallas_src>
import functools
import math
import random

import numpy as np

import jax
import jax.numpy as jnp
from jax.experimental import pallas as pl
from jax.experimental.pallas import tpu as pltpu


_LOWPASS_FILTER_WIDTH = 6
_ROLLOFF = 0.99


def _sinc_resample_kernel_np(orig_r, new_r):
    """torchaudio sinc_interp_hann kernel, built in float64. Returns ((new_r, kw), width, kw)."""
    base_freq = min(orig_r, new_r) * _ROLLOFF
    width = int(math.ceil(_LOWPASS_FILTER_WIDTH * orig_r / base_freq))
    kw = 2 * width + orig_r
    idx = np.arange(-width, width + orig_r, dtype=np.float64) / orig_r          # (kw,)
    t = np.arange(0, -new_r, -1, dtype=np.float64)[:, None] / new_r + idx[None]  # (new_r, kw)
    t = t * base_freq
    t = np.clip(t, -_LOWPASS_FILTER_WIDTH, _LOWPASS_FILTER_WIDTH)
    window = np.cos(t * math.pi / _LOWPASS_FILTER_WIDTH / 2.0) ** 2
    t = t * math.pi
    scale = base_freq / orig_r
    kern = np.where(t == 0.0, 1.0, np.sin(t) / np.where(t == 0.0, 1.0, t))
    kern = kern * window * scale
    return kern, width, kw


@functools.lru_cache(maxsize=None)
def _build_resampler(C, L, orig_r, new_r, out_dtype_name):
    """Builds (and caches) a jitted resampler for fixed (C, L, orig_r, new_r)."""
    out_dtype = np.dtype(out_dtype_name)

    kern, width, kw = _sinc_resample_kernel_np(orig_r, new_r)   # (new_r, kw) float64
    m = -(-kw // orig_r)                                        # ceil(kw / orig_r), always >= 2
    # Zero-pad the kernel taps from kw up to m*orig_r (exact polyphase decomposition).
    kmatT = np.zeros((new_r, m * orig_r), dtype=np.float32)
    kmatT[:, :kw] = kern.astype(np.float32)

    n_frames = L // orig_r + 1
    target_len = -((-new_r * L) // orig_r)                      # ceil(new_r * L / orig_r)

    # Frame tile: multiple of 128 (lane-dense blocks), sized to stay far below the
    # scoped-VMEM defaults (16 MiB v5e, 32 MiB v6e/v7x; v7x has 64 MiB physical).
    tile_f = min(1024, 128 * (-(-n_frames // 128)))

    def _vmem_bytes(tf):  # double-buffered in/out blocks + halo + kernel matrix (f32)
        return 4 * (2 * orig_r * tf + 2 * new_r * tf
                    + 2 * orig_r * (m - 1) + new_r * m * orig_r)

    while tile_f > 128 and _vmem_bytes(tile_f) > 12 * 1024 * 1024:
        tile_f -= 128

    n_tiles = -(-n_frames // tile_f)
    n_frames_pad = n_tiles * tile_f
    n_chunks_big = (n_tiles + 1) * tile_f          # chunks available (incl. halo + slack)
    total_len = n_chunks_big * orig_r
    # Must cover torchaudio's F.pad(x, (width, width + orig_r)).
    assert total_len >= L + 2 * width + orig_r

    kmatT_dev = jnp.asarray(kmatT)                 # (new_r, m*orig_r)

    def _polyphase_kernel(x_ref, h_ref, k_ref, o_ref):
        # x_ref: (1, orig_r, tile_f)        time-chunks of this tile (time on lanes)
        # h_ref: (1, 1, orig_r, m-1)        halo chunks from the next tile
        # k_ref: (new_r, m*orig_r)          zero-padded sinc kernel (transposed)
        # o_ref: (1, 1, new_r, tile_f)      lane-dense output block
        main = x_ref[0]                                    # (orig_r, tile_f)
        halo = h_ref[0, 0]                                 # (orig_r, m-1)
        allc = jnp.concatenate([main, halo], axis=1)       # (orig_r, tile_f + m - 1)
        acc = jnp.dot(k_ref[:, :orig_r], main,
                      preferred_element_type=jnp.float32)  # slab j = 0
        for j in range(1, m):                              # m is small & static (2-4)
            acc = acc + jnp.dot(k_ref[:, j * orig_r:(j + 1) * orig_r],
                                allc[:, j:j + tile_f],
                                preferred_element_type=jnp.float32)
        o_ref[0, 0] = acc

    conv = pl.pallas_call(
        _polyphase_kernel,
        out_shape=jax.ShapeDtypeStruct((C, n_tiles, new_r, tile_f), jnp.float32),
        grid=(C, n_tiles),
        in_specs=[
            pl.BlockSpec((1, orig_r, tile_f), lambda c, t: (c, 0, t)),
            pl.BlockSpec((1, 1, orig_r, m - 1), lambda c, t: (c, t, 0, 0)),
            pl.BlockSpec((new_r, m * orig_r), lambda c, t: (0, 0)),
        ],
        out_specs=pl.BlockSpec((1, 1, new_r, tile_f), lambda c, t: (c, t, 0, 0)),
        compiler_params=pltpu.CompilerParams(
            dimension_semantics=("parallel", "parallel")),
    )

    def run(x):
        xf = x.astype(jnp.float32)
        # torchaudio left pad = width; extend the right pad with zeros up to total_len
        # (extra zeros only feed zero kernel taps or truncated frames).
        padded = jnp.pad(xf, ((0, 0), (width, total_len - L - width)))
        chunks = padded.reshape(C, n_chunks_big, orig_r)
        chunksT = chunks.transpose(0, 2, 1)                               # (C, orig_r, n_chunks_big)
        haloT = (chunksT.reshape(C, orig_r, n_tiles + 1, tile_f)[:, :, 1:, :m - 1]
                 .transpose(0, 2, 1, 3))                                  # (C, n_tiles, orig_r, m-1)
        out = conv(chunksT, haloT, kmatT_dev)                             # (C, n_tiles, new_r, tile_f)
        flat = out.transpose(0, 1, 3, 2).reshape(C, n_frames_pad * new_r)
        return flat[:, :target_len].astype(out_dtype)

    return jax.jit(run)


def resample_pallas(x, orig_freq, new_freq):
    """Resample a (C, T) waveform from orig_freq to new_freq (torchaudio sinc_interp_hann)."""
    g = math.gcd(int(orig_freq), int(new_freq))
    orig_r = int(orig_freq) // g
    new_r = int(new_freq) // g
    if orig_r == new_r:
        return x
    C, L = x.shape
    fn = _build_resampler(C, L, orig_r, new_r, np.dtype(x.dtype).name)
    return fn(x)


def _resample_reference(x, orig_freq, new_freq):
    """Pure-JAX (VPU, exact f32) reference for correctness checking."""
    g = math.gcd(int(orig_freq), int(new_freq))
    orig_r = int(orig_freq) // g
    new_r = int(new_freq) // g
    if orig_r == new_r:
        return x
    C, L = x.shape
    kern, width, kw = _sinc_resample_kernel_np(orig_r, new_r)
    kmat = jnp.asarray(kern.T.astype(np.float32))                         # (kw, new_r)
    padded = jnp.pad(x.astype(jnp.float32), ((0, 0), (width, width + orig_r)))
    n_frames = (padded.shape[1] - kw) // orig_r + 1
    frames = jnp.stack([padded[:, f * orig_r:f * orig_r + kw] for f in range(n_frames)],
                       axis=1)                                            # (C, n_frames, kw)
    out = jnp.sum(frames[:, :, :, None] * kmat[None, None, :, :], axis=2)  # (C, n_frames, new_r)
    target_len = -((-new_r * L) // orig_r)
    return out.reshape(C, -1)[:, :target_len].astype(x.dtype)


class Speed:
    """JAX/Pallas port of the PyTorch Speed augmentation module (no learned params)."""

    def __init__(self, p, factors, sample_rate):
        assert all(v > 0 for v in factors), (
            f"please set elements greater than 0 in factors.\nfactors: {factors}")
        self.p = p
        self.a = sorted(factors)[0]
        self.b = sorted(factors)[1]   # NOTE: mirrors the PyTorch module (second-smallest factor).
        self.sample_rate = sample_rate
        self.effects = ["speed"]

    def forward(self, x, rng=None):
        # Host-side random gate + factor draw (no device round trips), mirrors torch.rand(1).item().
        rng = rng if rng is not None else random
        if rng.random() < self.p:
            factor = (self.b - self.a) * rng.random() + self.a
            # sox 'speed' (without an auto 'rate' effect) leaves samples unchanged and only
            # relabels the stream rate; the module then resamples sample_rate -> new rate.
            # TODO(synk): exact sox-internal sample-rate rounding is not replicated.
            new_sample_rate = int(round(self.sample_rate * factor))
            if new_sample_rate != self.sample_rate:
                x = resample_pallas(x, self.sample_rate, new_sample_rate)
        return x


if __name__ == "__main__":
    key = jax.random.PRNGKey(0)
    C, L = 2, 2048
    x = jax.random.normal(key, (C, L), dtype=jnp.float32)

    # 1) Deterministic kernel check against a pure-JAX reference (toy rate so the reduced
    #    polyphase factors stay small: 160 -> 176 == orig_r 10, new_r 11).
    x_small = x[:, :512]
    y_kernel = resample_pallas(x_small, 160, 176)
    y_ref = _resample_reference(x_small, 160, 176)
    assert y_kernel.shape == y_ref.shape, (y_kernel.shape, y_ref.shape)
    max_err = float(jnp.max(jnp.abs(y_kernel - y_ref)))
    assert max_err < 2e-2, f"kernel mismatch vs reference: {max_err}"

    # 2) Full Speed module forward (p=1.0 so the augmentation always fires).
    mod = Speed(p=1.0, factors=(0.9, 1.1), sample_rate=160)
    y = mod.forward(x, rng=random.Random(0))
    jax.block_until_ready(y)
    print("KERNEL_OK")
</pallas_src>

<mosaic_0001>
module attributes {stable_mosaic.version = 11 : i64} {
  func.func @_polyphase_kernel(%arg0: i32, %arg1: i32, %arg2: memref<1x10x128xf32, #tpu.memory_space<vmem>>, %arg3: memref<1x1x10x2xf32, #tpu.memory_space<vmem>>, %arg4: memref<11x30xf32, #tpu.memory_space<vmem>>, %arg5: memref<1x1x11x128xf32, #tpu.memory_space<vmem>>) attributes {dimension_semantics = [#tpu.dimension_semantics<parallel>, #tpu.dimension_semantics<parallel>], iteration_bounds = array<i64: 2, 1>, scalar_prefetch = 0 : i64, scratch_operands = 0 : i64, tpu.core_type = #tpu.core_type<tc>, window_params = [{transform_indices = @transform_0, window_bounds = array<i64: 1, 10, 128>}, {transform_indices = @transform_1, window_bounds = array<i64: 1, 1, 10, 2>}, {pipeline_mode = #tpu.pipeline_mode<synchronous>, transform_indices = @transform_2, window_bounds = array<i64: 11, 30>}, {transform_indices = @transform_3, window_bounds = array<i64: 1, 1, 11, 128>}]} {
    %c0 = arith.constant 0 : index
    %c0_0 = arith.constant 0 : index
    %c0_1 = arith.constant 0 : index
    %0 = vector.load %arg2[%c0, %c0_0, %c0_1] : memref<1x10x128xf32, #tpu.memory_space<vmem>>, vector<1x10x128xf32>
    %1 = vector.shape_cast %0 : vector<1x10x128xf32> to vector<10x128xf32>
    %c0_2 = arith.constant 0 : index
    %c0_3 = arith.constant 0 : index
    %c0_4 = arith.constant 0 : index
    %c0_5 = arith.constant 0 : index
    %2 = vector.load %arg3[%c0_2, %c0_3, %c0_4, %c0_5] : memref<1x1x10x2xf32, #tpu.memory_space<vmem>>, vector<1x1x10x2xf32>
    %3 = vector.shape_cast %2 : vector<1x1x10x2xf32> to vector<10x2xf32>
    %4 = tpu.concatenate %1, %3 in 1 : vector<10x128xf32>, vector<10x2xf32> -> vector<10x130xf32>
    %c0_6 = arith.constant 0 : index
    %c0_7 = arith.constant 0 : index
    %5 = vector.load %arg4[%c0_6, %c0_7] : memref<11x30xf32, #tpu.memory_space<vmem>>, vector<11x10xf32>
    %cst = arith.constant dense<0.000000e+00> : vector<11x128xf32>
    %6 = tpu.matmul %5, %1, %cst {dimension_numbers = #tpu.dot_dimension_numbers<[1], [0], [0], [1], [0, 0, 1, 1], [], []>} : vector<11x10xf32>, vector<10x128xf32>, vector<11x128xf32> -> vector<11x128xf32>
    %c0_8 = arith.constant 0 : index
    %c10 = arith.constant 10 : index
    %7 = vector.load %arg4[%c0_8, %c10] : memref<11x30xf32, #tpu.memory_space<vmem>>, vector<11x10xf32>
    %8 = vector.extract_strided_slice %4 {offsets = [0, 1], sizes = [10, 128], strides = [1, 1]} : vector<10x130xf32> to vector<10x128xf32>
    %cst_9 = arith.constant dense<0.000000e+00> : vector<11x128xf32>
    %9 = tpu.matmul %7, %8, %cst_9 {dimension_numbers = #tpu.dot_dimension_numbers<[1], [0], [0], [1], [0, 0, 1, 1], [], []>} : vector<11x10xf32>, vector<10x128xf32>, vector<11x128xf32> -> vector<11x128xf32>
    %10 = arith.addf %6, %9 : vector<11x128xf32>
    %c0_10 = arith.constant 0 : index
    %c20 = arith.constant 20 : index
    %11 = vector.load %arg4[%c0_10, %c20] : memref<11x30xf32, #tpu.memory_space<vmem>>, vector<11x10xf32>
    %12 = vector.extract_strided_slice %4 {offsets = [0, 2], sizes = [10, 128], strides = [1, 1]} : vector<10x130xf32> to vector<10x128xf32>
    %cst_11 = arith.constant dense<0.000000e+00> : vector<11x128xf32>
    %13 = tpu.matmul %11, %12, %cst_11 {dimension_numbers = #tpu.dot_dimension_numbers<[1], [0], [0], [1], [0, 0, 1, 1], [], []>} : vector<11x10xf32>, vector<10x128xf32>, vector<11x128xf32> -> vector<11x128xf32>
    %14 = arith.addf %10, %13 : vector<11x128xf32>
    %c0_12 = arith.constant 0 : index
    %c0_13 = arith.constant 0 : index
    %c0_14 = arith.constant 0 : index
    %c0_15 = arith.constant 0 : index
    %15 = vector.load %arg5[%c0_12, %c0_13, %c0_14, %c0_15] : memref<1x1x11x128xf32, #tpu.memory_space<vmem>>, vector<1x1x11x128xf32>
    %16 = vector.shape_cast %15 : vector<1x1x11x128xf32> to vector<11x128xf32>
    %17 = vector.shape_cast %14 : vector<11x128xf32> to vector<1x1x11x128xf32>
    tpu.vector_store %arg5[%c0_12, %c0_13, %c0_14, %c0_15], %17 {strides = array<i32>} : memref<1x1x11x128xf32, #tpu.memory_space<vmem>>, vector<1x1x11x128xf32>,
    return
  }
  func.func @transform_0(%arg0: i32, %arg1: i32) -> (i32, i32, i32) {
    %c0_i32 = arith.constant 0 : i32
    %c0_i32_0 = arith.constant 0 : i32
    return %arg0, %c0_i32, %arg1 : i32, i32, i32
  }
  func.func @transform_1(%arg0: i32, %arg1: i32) -> (i32, i32, i32, i32) {
    %c0_i32 = arith.constant 0 : i32
    %c0_i32_0 = arith.constant 0 : i32
    %c0_i32_1 = arith.constant 0 : i32
    return %arg0, %arg1, %c0_i32, %c0_i32_0 : i32, i32, i32, i32
  }
  func.func @transform_2(%arg0: i32, %arg1: i32) -> (i32, i32) {
    %c0_i32 = arith.constant 0 : i32
    %c0_i32_0 = arith.constant 0 : i32
    %c0_i32_1 = arith.constant 0 : i32
    return %c0_i32, %c0_i32_0 : i32, i32
  }
  func.func @transform_3(%arg0: i32, %arg1: i32) -> (i32, i32, i32, i32) {
    %c0_i32 = arith.constant 0 : i32
    %c0_i32_0 = arith.constant 0 : i32
    %c0_i32_1 = arith.constant 0 : i32
    return %arg0, %arg1, %c0_i32, %c0_i32_0 : i32, i32, i32, i32
  }
}

</mosaic_0001>

<llo_original>
// kernel: run.1
$region0: #{run.1}
  #allocation0 [shape = 'u32[]', space=smem, size = 0x4, offset = 0x4, fixed_abs, tag = 'smem constant byte address 0x4 - core index']
  #allocation1 [shape = 'u32[144,128]{1,0:T(1,128)}', space=vmem, size = 0x12000, scoped, tag = 'internal scratch']
  %s0 = inlined_call_operand.vmem [shape: f32[2,10,256], index: 0, kind: input, shape index: {}]
  %s1 = inlined_call_operand.vmem [shape: f32[2,1,10,2], index: 1, kind: input, shape index: {}]
  %s2 = inlined_call_operand.vmem [shape: f32[11,30], index: 2, kind: input, shape index: {}]
  %s3 = inlined_call_operand.vmem [shape: f32[2,1,11,128], index: 3, kind: output, shape index: {}]
  %s4 = sld [smem:[#allocation0]]
  $region83: #{run.1} parent=0
    _
  %s6 = ssub.s32 1, %s4
  %s7 = scalar_select 0, %s6, %s4
  $region1: #{run.1} parent=0
    #allocation2 [shape = 'u8[16384]{0}', space=vmem, size = 0x4000, scoped, tag = 'input window, operand 0']
    loop: start=0, step=1, limit=4
    $region2: #{run.1} parent=1 // loop_pre_header
      _
    $region3: #{run.1} parent=1 // loop_header
      %s9 = sphi 0, %s13
      %p10 = scmp.ge.s32.totalorder %s9, 4
      %s16 = sphi 0, %s28
      %s17 = sphi 0, %s24
      %s18 = sphi 0, %s16
      %s19 = sphi 0, %s17
      %s20 = sphi 0, %s18
      %s21 = sphi 0, %s19
      %s33 = sphi 0, %s35
      %s36 = sphi 0, %s33
      %s37 = sphi 0, %s36
      %s53 = sphi 0, %s37
      %s61 = sphi 0, %s63
      %s64 = sphi 0, %s61
      %s65 = sphi 0, %s64
      %s81 = sphi 0, %s65
      %s85 = sphi 0, %s85
      %s87 = sphi 0, %s85
      %s88 = sphi 0, %s87
      %s102 = sphi 0, %s88
      %s110 = sphi 0, %s112
      %s113 = sphi 0, %s110
      %s114 = sphi 0, %s113
      %s130 = sphi 0, %s114
    $region4: #{run.1} parent=1 // loop_header_branch
      %12 = sbr.rel (%p10) target = $region8
    $region5: #{run.1} parent=1 // loop_body
      %s14 = ssub.s32 %s9, 1
      %s15 = ssub.s32 %s9, 2
      %s22 = sadd.s32 1, %s17
      %p23 = scmp.ge.s32.totalorder %s22, 1
      %s24 = scalar_select %p23, 0, %s22
      %s25 = sadd.s32 1, %s16
      %s26 = scalar_select %p23, %s25, %s16
      %p27 = scmp.ge.s32.totalorder %s26, 2
      %s28 = scalar_select %p27, 0, %s26
      %s29 = ssub.s32 %s16, %s28
      %s30 = ssub.s32 %s17, %s24
      %s31 = sor.u32 %s29, %s30
      %p32 = scmp.eq.s32.totalorder %s31, 0
      %s34 = sadd.s32 %s33, 1
      %s35 = scalar_select %p32, %s33, %s34
      %p38 = pneg %p32
      %p39 = scmp.eq.s32.totalorder %s9, 1
      %p40 = por %p38, %p39
      %p41 = scmp.ne.s32.totalorder %s33, %s36
      %p42 = scmp.eq.s32.totalorder %s9, 0
      %p43 = por %p41, %p42
      %p44 = scmp.ne.s32.totalorder %s33, %s36
      %p45 = scmp.eq.s32.totalorder %s14, 1
      %p46 = por %p44, %p45
      %p47 = scmp.ne.s32.totalorder %s36, %s37
      %p48 = scmp.eq.s32.totalorder %s14, 0
      %p49 = por %p47, %p48
      %p50 = scmp.ne.s32.totalorder %s36, %s37
      %p51 = scmp.eq.s32.totalorder %s15, 1
      %p52 = por %p50, %p51
      %p54 = scmp.ne.s32.totalorder %s37, %s53
      %p55 = scmp.eq.s32.totalorder %s15, 0
      %p56 = por %p54, %p55
      %s57 = ssub.s32 %s16, %s28
      %s58 = ssub.s32 %s17, %s24
      %s59 = sor.u32 %s57, %s58
      %p60 = scmp.eq.s32.totalorder %s59, 0
      %s62 = sadd.s32 %s61, 1
      %s63 = scalar_select %p60, %s61, %s62
      %p66 = pneg %p60
      %p67 = scmp.eq.s32.totalorder %s9, 1
      %p68 = por %p66, %p67
      %p69 = scmp.ne.s32.totalorder %s61, %s64
      %p70 = scmp.eq.s32.totalorder %s9, 0
      %p71 = por %p69, %p70
      %p72 = scmp.ne.s32.totalorder %s61, %s64
      %p73 = scmp.eq.s32.totalorder %s14, 1
      %p74 = por %p72, %p73
      %p75 = scmp.ne.s32.totalorder %s64, %s65
      %p76 = scmp.eq.s32.totalorder %s14, 0
      %p77 = por %p75, %p76
      %p78 = scmp.ne.s32.totalorder %s64, %s65
      %p79 = scmp.eq.s32.totalorder %s15, 1
      %p80 = por %p78, %p79
      %p82 = scmp.ne.s32.totalorder %s65, %s81
      %p83 = scmp.eq.s32.totalorder %s15, 0
      %p84 = por %p82, %p83
      %s86 = sadd.s32 %s85, 1
      %p89 = scmp.eq.s32.totalorder %s9, 1
      %p90 = scmp.ne.s32.totalorder %s85, %s87
      %p91 = scmp.eq.s32.totalorder %s9, 0
      %p92 = por %p90, %p91
      %p93 = scmp.ne.s32.totalorder %s85, %s87
      %p94 = scmp.eq.s32.totalorder %s14, 1
      %p95 = por %p93, %p94
      %p96 = scmp.ne.s32.totalorder %s87, %s88
      %p97 = scmp.eq.s32.totalorder %s14, 0
      %p98 = por %p96, %p97
      %p99 = scmp.ne.s32.totalorder %s87, %s88
      %p100 = scmp.eq.s32.totalorder %s15, 1
      %p101 = por %p99, %p100
      %p103 = scmp.ne.s32.totalorder %s88, %s102
      %p104 = scmp.eq.s32.totalorder %s15, 0
      %p105 = por %p103, %p104
      %s106 = ssub.s32 %s16, %s28
      %s107 = ssub.s32 %s17, %s24
      %s108 = sor.u32 %s106, %s107
      %p109 = scmp.eq.s32.totalorder %s108, 0
      %s111 = sadd.s32 %s110, 1
      %s112 = scalar_select %p109, %s110, %s111
      %p115 = pneg %p109
      %p116 = scmp.eq.s32.totalorder %s9, 1
      %p117 = por %p115, %p116
      %p118 = scmp.ne.s32.totalorder %s110, %s113
      %p119 = scmp.eq.s32.totalorder %s9, 0
      %p120 = por %p118, %p119
      %p121 = scmp.ne.s32.totalorder %s110, %s113
      %p122 = scmp.eq.s32.totalorder %s14, 1
      %p123 = por %p121, %p122
      %p124 = scmp.ne.s32.totalorder %s113, %s114
      %p125 = scmp.eq.s32.totalorder %s14, 0
      %p126 = por %p124, %p125
      %p127 = scmp.ne.s32.totalorder %s113, %s114
      %p128 = scmp.eq.s32.totalorder %s15, 1
      %p129 = por %p127, %p128
      %p131 = scmp.ne.s32.totalorder %s114, %s130
      %p132 = scmp.eq.s32.totalorder %s15, 0
      %p133 = por %p131, %p132
      %p134 = scmp.le.s32.totalorder 1, %s9
      %p135 = scmp.lt.s32.totalorder %s9, 3
      %p136 = pnand %p134, %p135
      %p137 = pneg %p136
      // Predicated region
      $region9: #{run.1} parent=5 // pred_check
        _
      $region10: #{run.1} parent=5 // pred_check_branch
        %139 = sbr.rel (%p136) target = $region12
      $region11: #{run.1} parent=5 // pred_region
        %s140 = ssub.s32 %s9, 1
        // Predicated region
        $region13: #{run.1} parent=11 // pred_check
          %p141 = pneg %p98
        $region14: #{run.1} parent=11 // pred_check_branch
          %143 = sbr.rel (%p141) target = $region16
        $region15: #{run.1} parent=11 // pred_region
          _
        $region16: #{run.1} parent=11 // pred_fallthru
          _
      $region12: #{run.1} parent=5 // pred_fallthru
        _
      %p144 = scmp.lt.s32.totalorder %s9, 2
      // Predicated region
      $region17: #{run.1} parent=5 // pred_check
        %p145 = pneg %p144
      $region18: #{run.1} parent=5 // pred_check_branch
        %147 = sbr.rel (%p145) target = $region20
      $region19: #{run.1} parent=5 // pred_region
        // Predicated region
        $region21: #{run.1} parent=19 // pred_check
          %p148 = pneg %p43
        $region22: #{run.1} parent=19 // pred_check_branch
          %150 = sbr.rel (%p148) target = $region24
        $region23: #{run.1} parent=19 // pred_region
          %s151 = sand.u32 %s33, 1
          %s152 = sand.u32 %s33, 1
          %s153 = smul.addr %s152, 16
          %s154 = scalar_lea.vmem [#allocation2], %s153
          %s155 = smul.addr %s16, 4
          %s156 = sadd.s32 %s17, %s155
          %s157 = smul.addr %s156, 8
          %s158 = scalar_lea.vmem %s0, %s157
          // Predicated region
          $region25: #{run.1} parent=23 // pred_check
            _
          $region26: #{run.1} parent=23 // pred_check_branch
            %160 = sbr.rel (0) target = $region28
          $region27: #{run.1} parent=23 // pred_region
            // Predicated region
            $region29: #{run.1} parent=27 // pred_check
              _
            $region30: #{run.1} parent=27 // pred_check_branch
              %162 = sbr.rel (0) target = $region32
            $region31: #{run.1} parent=27 // pred_region
              // Predicated region
              $region44: #{run.1} parent=31 // pred_check
                _
              $region45: #{run.1} parent=31 // pred_check_branch
                %179 = sbr.rel (0) target = $region47
              $region46: #{run.1} parent=31 // pred_region
                loop: start=0, step=1, limit=1
                $region48: #{run.1} parent=46 // loop_pre_header
                  _
                $region49: #{run.1} parent=46 // loop_header
                  %s181 = sphi 0, %s185
                  %p182 = scmp.ge.s32.totalorder %s181, 1
                  %s186 = sphi %s158, %s158
                  %s187 = sphi %s154, %s154
                $region50: #{run.1} parent=46 // loop_header_branch
                  %184 = sbr.rel (%p182) target = $region54
                $region51: #{run.1} parent=46 // loop_body
                  %v188 = vld [vmem:[%s186] sm:$0xff]
                  %189 = vst [vmem:[%s187] sm:$0xff] %v188
                  %v190 = vld [vmem:[%s186 + $0x10] sm:$0xff]
                  %191 = vst [vmem:[%s187 + $0x8] sm:$0xff] %v190
                $region52: #{run.1} parent=46 // loop_footer
                  %s185 = sadd.s32 1, %s181
                $region53: #{run.1} parent=46 // loop_footer_branch
                  %180 = sbr.rel target = $region49
                $region54: #{run.1} parent=46 // loop_exit
                  _
              $region47: #{run.1} parent=31 // pred_fallthru
                _
              // Predicated region
              $region55: #{run.1} parent=31 // pred_check
                _
              $region56: #{run.1} parent=31 // pred_check_branch
                %193 = sbr.rel target = $region58
              $region57: #{run.1} parent=31 // pred_region
                _
              $region58: #{run.1} parent=31 // pred_fallthru
                _
            $region32: #{run.1} parent=27 // pred_fallthru
              _
            // Predicated region
            $region33: #{run.1} parent=27 // pred_check
              _
            $region34: #{run.1} parent=27 // pred_check_branch
              %164 = sbr.rel target = $region36
            $region35: #{run.1} parent=27 // pred_region
              loop: start=0, step=1, limit=1
              $region37: #{run.1} parent=35 // loop_pre_header
                _
              $region38: #{run.1} parent=35 // loop_header
                %s167 = sphi 0, %s171
                %p168 = scmp.ge.s32.totalorder %s167, 1
                %s172 = sphi %s158, %s158
                %s173 = sphi %s154, %s154
              $region39: #{run.1} parent=35 // loop_header_branch
                %170 = sbr.rel (%p168) target = $region43
              $region40: #{run.1} parent=35 // loop_body
                %v174 = vld [vmem:[%s172] sm:$0xff]
                %175 = vst [vmem:[%s173] sm:$0xff] %v174
                %v176 = vld [vmem:[%s172 + $0x10] sm:$0xff]
                %177 = vst [vmem:[%s173 + $0x8] sm:$0xff] %v176
              $region41: #{run.1} parent=35 // loop_footer
                %s171 = sadd.s32 1, %s167
              $region42: #{run.1} parent=35 // loop_footer_branch
                %166 = sbr.rel target = $region38
              $region43: #{run.1} parent=35 // loop_exit
                _
            $region36: #{run.1} parent=27 // pred_fallthru
              _
          $region28: #{run.1} parent=23 // pred_fallthru
            _
          %194 = vnop
        $region24: #{run.1} parent=19 // pred_fallthru
          _
        // Predicated region
        $region59: #{run.1} parent=19 // pred_check
          %p195 = pneg %p71
        $region60: #{run.1} parent=19 // pred_check_branch
          %197 = sbr.rel (%p195) target = $region62
        $region61: #{run.1} parent=19 // pred_region
          %p198 = scmp.lt.s32.totalorder %s16, 1
          %s199 = scalar_select %p198, %s16, 1
          %p200 = scmp.lt.s32.totalorder %s17, 0
          %s201 = scalar_select %p200, %s17, 0
          %s202 = smul.addr %s201, 2
          %s203 = smul.addr %s199, 2
          %s204 = sadd.s32 %s202, %s203
          %s205 = smul.addr %s204, 8
          %s206 = scalar_lea.vmem %s1, %s205
        $region62: #{run.1} parent=19 // pred_fallthru
          _
      $region20: #{run.1} parent=5 // pred_fallthru
        _
      %p207 = scmp.le.s32.totalorder 1, %s9
      %p208 = scmp.lt.s32.totalorder %s9, 3
      %p209 = pnand %p207, %p208
      %p210 = pneg %p209
      // Predicated region
      $region63: #{run.1} parent=5 // pred_check
        _
      $region64: #{run.1} parent=5 // pred_check_branch
        %212 = sbr.rel (%p209) target = $region66
      $region65: #{run.1} parent=5 // pred_region
        %s213 = ssub.s32 %s9, 1
        %s214 = sand.u32 %s36, 1
        %s215 = sand.u32 %s36, 1
        %s216 = smul.addr %s215, 16
        %s217 = scalar_lea.vmem [#allocation2], %s216
        // Predicated region
        $region67: #{run.1} parent=65 // pred_check
          %p218 = pneg %p49
        $region68: #{run.1} parent=65 // pred_check_branch
          %220 = sbr.rel (%p218) target = $region70
        $region69: #{run.1} parent=65 // pred_region
          _
        $region70: #{run.1} parent=65 // pred_fallthru
          _
        %s221 = sand.u32 %s36, 1
        %s222 = sand.u32 %s36, 1
        %s223 = smul.addr %s222, 16
        %s224 = scalar_lea.vmem [#allocation2], %s223
        %p225 = pneg %p49
        %p226 = pneg %p46
        %p227 = scmp.lt.s32.totalorder %s18, 1
        %s228 = scalar_select %p227, %s18, 1
        %p229 = scmp.lt.s32.totalorder %s19, 0
        %s230 = scalar_select %p229, %s19, 0
        %s231 = smul.addr %s230, 2
        %s232 = smul.addr %s228, 2
        %s233 = sadd.s32 %s231, %s232
        %s234 = smul.addr %s233, 8
        %s235 = scalar_lea.vmem %s1, %s234
        %p236 = pneg %p77
        %p237 = pneg %p74
        %p238 = pneg %p98
        %p239 = pneg %p95
        %p240 = pneg %p126
        %p241 = pneg %p123
        %p242 = scmp.lt.s32.totalorder %s18, 1
        %s243 = scalar_select %p242, %s18, 1
        %p244 = scmp.lt.s32.totalorder %s19, 0
        %s245 = scalar_select %p244, %s19, 0
        %s246 = smul.addr %s245, 2
        %s247 = smul.addr %s243, 2
        %s248 = sadd.s32 %s246, %s247
        %s249 = smul.addr %s248, 8
        %s250 = scalar_lea.vmem %s3, %s249
        %p251 = scmp.lt.s32.totalorder %s18, 1
        %s252 = scalar_select %p251, %s18, 1
        %p253 = scmp.lt.s32.totalorder %s19, 0
        %s254 = scalar_select %p253, %s19, 0
        %s255 = smul.addr %s254, 2
        %s256 = smul.addr %s252, 2
        %s257 = sadd.s32 %s255, %s256
        %s258 = smul.addr %s257, 8
        %s259 = scalar_lea.vmem %s1, %s258
        %p260 = scmp.lt.s32.totalorder %s18, 1
        %s261 = scalar_select %p260, %s18, 1
        %p262 = scmp.lt.s32.totalorder %s19, 0
        %s263 = scalar_select %p262, %s19, 0
        %s264 = smul.addr %s263, 2
        %s265 = smul.addr %s261, 2
        %s266 = sadd.s32 %s264, %s265
        %s267 = smul.addr %s266, 8
        %s268 = scalar_lea.vmem %s3, %s267
        %v269 = vld [vmem:[%s217] sm:$0xff]
        %v270 = vld [vmem:[%s217 + $0x8] sm:$0x3]
        %v271 = vld [vmem:[%s259] sm:$0xff]
        %v272 = vld [vmem:[%s259 + $0x8] sm:$0x3]
        %v273 = vld [vmem:[%s2] sm:$0xff]
        %v274 = vld [vmem:[%s2 + $0x8] sm:$0x7]
        %277 = vrot.lane.b32.xlu0 %v273, 118
        %v278 = vpop.permute.xlu0 %277
        %279 = vrot.lane.b32.xlu0 %v274, 118
        %v280 = vpop.permute.xlu0 %279
        %285 = vrot.lane.b32.xlu0 %v269, 127
        %v286 = vpop.permute.xlu0 %285
        %287 = vrot.lane.b32.xlu0 %v271, 127
        %v288 = vpop.permute.xlu0 %287
        %289 = vrot.lane.b32.xlu0 %v270, 127
        %v290 = vpop.permute.xlu0 %289
        %291 = vrot.lane.b32.xlu0 %v272, 127
        %v292 = vpop.permute.xlu0 %291
        %vm293 = vcmask 1039360
        %v294 = vsel %vm293, %v286, %v288
        %v295 = vsel %vm293, %v290, %v292
        %vm297 = vcmask 80896
        %v298 = vsel %vm297, %v278, 0
        %v300 = vsel %vm297, %v280, 0
        %vm302 = vcmask 1041408
        %v303 = vsel %vm302, %v295, 0
        %305 = vmatprep.subr.mxu0 0.0
        %306 = vmatpush1.msra.mxu0 %v294
        %307 = vmatprep.subr.mxu0 0.0
        %308 = vmatpush1.msra.mxu0 %v303
        %309 = vmatprep.subr.mxu0 0.0
        %310 = vmatpush1.msra.mxu0 0.0
        %311 = vmatprep.subr.mxu0 0.0
        %312 = vmatpush1.msra.mxu0 0.0
        %313 = vmatprep.subr.mxu0 0.0
        %314 = vmatpush1.msra.mxu0 0.0
        %315 = vmatprep.subr.mxu0 0.0
        %316 = vmatpush1.msra.mxu0 0.0
        %317 = vmatprep.subr.mxu0 0.0
        %318 = vmatpush1.msra.mxu0 0.0
        %319 = vmatprep.subr.mxu0 0.0
        %320 = vmatpush1.msra.mxu0 0.0
        %321 = vmatprep.subr.mxu0 0.0
        %322 = vmatpush1.msra.mxu0 0.0
        %323 = vmatprep.subr.mxu0 0.0
        %324 = vmatpush1.msra.mxu0 0.0
        %325 = vmatprep.subr.mxu0 0.0
        %326 = vmatpush1.msra.mxu0 0.0
        %327 = vmatprep.subr.mxu0 0.0
        %328 = vmatpush1.msra.mxu0 0.0
        %329 = vmatprep.subr.mxu0 0.0
        %330 = vmatpush1.msra.mxu0 0.0
        %331 = vmatprep.subr.mxu0 0.0
        %332 = vmatpush1.msra.mxu0 0.0
        %333 = vmatprep.subr.mxu0 0.0
        %334 = vmatpush1.msra.mxu0 0.0
        %335 = vmatprep.subr.mxu0 0.0
        %336 = vmatpush1.msra.mxu0 0.0
        %337 = vmatprep.subr.mxu0 0.0
        %338 = vmatpush1.msra.mxu0 0.0
        %339 = vmatprep.subr.mxu0 0.0
        %340 = vmatpush1.msra.mxu0 0.0
        %341 = vmatprep.subr.mxu0 0.0
        %342 = vmatpush1.msra.mxu0 0.0
        %343 = vmatprep.subr.mxu0 0.0
        %344 = vmatpush1.msra.mxu0 0.0
        %345 = vmatprep.subr.mxu0 0.0
        %346 = vmatpush1.msra.mxu0 0.0
        %347 = vmatprep.subr.mxu0 0.0
        %348 = vmatpush1.msra.mxu0 0.0
        %349 = vmatprep.subr.mxu0 0.0
        %350 = vmatpush1.msra.mxu0 0.0
        %351 = vmatprep.subr.mxu0 0.0
        %352 = vmatpush1.msra.mxu0 0.0
        %353 = vmatprep.subr.mxu0 0.0
        %354 = vmatpush1.msra.mxu0 0.0
        %355 = vmatprep.subr.mxu0 0.0
        %356 = vmatpush1.msra.mxu0 0.0
        %357 = vmatprep.subr.mxu0 0.0
        %358 = vmatpush1.msra.mxu0 0.0
        %359 = vmatprep.subr.mxu0 0.0
        %360 = vmatpush1.msra.mxu0 0.0
        %361 = vmatprep.subr.mxu0 0.0
        %362 = vmatpush1.msra.mxu0 0.0
        %363 = vmatprep.subr.mxu0 0.0
        %364 = vmatpush1.msra.mxu0 0.0
        %365 = vmatprep.subr.mxu0 0.0
        %366 = vmatpush1.msra.mxu0 0.0
        %367 = vmatprep.subr.mxu0 0.0
        %368 = vmatpush1.msra.mxu0 0.0
        %369 = vmatprep.mubr.f32.mxu0 0.0
        %370 = vmatmul.mubr.f32.gmra.mrb[0].mxu0 %v298
        %v371 = vpop.f32.mrb[0].mxu0
        %v372 = vadd.f32 0.0, %v371
        %v373 = vpop.f32.mrb[0].mxu0
        %374 = vmatprep.mubr.f32.mxu0 0.0
        %375 = vmatmul.mubr.f32.gmra.mrb[0].mxu0 %v300
        %v376 = vpop.f32.mrb[0].mxu0
        %v377 = vadd.f32 0.0, %v376
        %v378 = vpop.f32.mrb[0].mxu0
        %379 = vdwg.mxu0
        %v380 = vsel %vm297, %v273, 0
        %v382 = vsel %vm297, %v274, 0
        %v384 = vsel %vm302, %v270, 0
        %386 = vmatprep.subr.mxu0 0.0
        %387 = vmatpush1.msra.mxu0 %v269
        %388 = vmatprep.subr.mxu0 0.0
        %389 = vmatpush1.msra.mxu0 %v384
        %390 = vmatprep.subr.mxu0 0.0
        %391 = vmatpush1.msra.mxu0 0.0
        %392 = vmatprep.subr.mxu0 0.0
        %393 = vmatpush1.msra.mxu0 0.0
        %394 = vmatprep.subr.mxu0 0.0
        %395 = vmatpush1.msra.mxu0 0.0
        %396 = vmatprep.subr.mxu0 0.0
        %397 = vmatpush1.msra.mxu0 0.0
        %398 = vmatprep.subr.mxu0 0.0
        %399 = vmatpush1.msra.mxu0 0.0
        %400 = vmatprep.subr.mxu0 0.0
        %401 = vmatpush1.msra.mxu0 0.0
        %402 = vmatprep.subr.mxu0 0.0
        %403 = vmatpush1.msra.mxu0 0.0
        %404 = vmatprep.subr.mxu0 0.0
        %405 = vmatpush1.msra.mxu0 0.0
        %406 = vmatprep.subr.mxu0 0.0
        %407 = vmatpush1.msra.mxu0 0.0
        %408 = vmatprep.subr.mxu0 0.0
        %409 = vmatpush1.msra.mxu0 0.0
        %410 = vmatprep.subr.mxu0 0.0
        %411 = vmatpush1.msra.mxu0 0.0
        %412 = vmatprep.subr.mxu0 0.0
        %413 = vmatpush1.msra.mxu0 0.0
        %414 = vmatprep.subr.mxu0 0.0
        %415 = vmatpush1.msra.mxu0 0.0
        %416 = vmatprep.subr.mxu0 0.0
        %417 = vmatpush1.msra.mxu0 0.0
        %418 = vmatprep.subr.mxu0 0.0
        %419 = vmatpush1.msra.mxu0 0.0
        %420 = vmatprep.subr.mxu0 0.0
        %421 = vmatpush1.msra.mxu0 0.0
        %422 = vmatprep.subr.mxu0 0.0
        %423 = vmatpush1.msra.mxu0 0.0
        %424 = vmatprep.subr.mxu0 0.0
        %425 = vmatpush1.msra.mxu0 0.0
        %426 = vmatprep.subr.mxu0 0.0
        %427 = vmatpush1.msra.mxu0 0.0
        %428 = vmatprep.subr.mxu0 0.0
        %429 = vmatpush1.msra.mxu0 0.0
        %430 = vmatprep.subr.mxu0 0.0
        %431 = vmatpush1.msra.mxu0 0.0
        %432 = vmatprep.subr.mxu0 0.0
        %433 = vmatpush1.msra.mxu0 0.0
        %434 = vmatprep.subr.mxu0 0.0
        %435 = vmatpush1.msra.mxu0 0.0
        %436 = vmatprep.subr.mxu0 0.0
        %437 = vmatpush1.msra.mxu0 0.0
        %438 = vmatprep.subr.mxu0 0.0
        %439 = vmatpush1.msra.mxu0 0.0
        %440 = vmatprep.subr.mxu0 0.0
        %441 = vmatpush1.msra.mxu0 0.0
        %442 = vmatprep.subr.mxu0 0.0
        %443 = vmatpush1.msra.mxu0 0.0
        %444 = vmatprep.subr.mxu0 0.0
        %445 = vmatpush1.msra.mxu0 0.0
        %446 = vmatprep.subr.mxu0 0.0
        %447 = vmatpush1.msra.mxu0 0.0
        %448 = vmatprep.subr.mxu0 0.0
        %449 = vmatpush1.msra.mxu0 0.0
        %450 = vmatprep.mubr.f32.mxu0 0.0
        %451 = vmatmul.mubr.f32.gmra.mrb[0].mxu0 %v380
        %v452 = vpop.f32.mrb[0].mxu0
        %v453 = vadd.f32 %v372, %v452
        %v454 = vpop.f32.mrb[0].mxu0
        %455 = vmatprep.mubr.f32.mxu0 0.0
        %456 = vmatmul.mubr.f32.gmra.mrb[0].mxu0 %v382
        %v457 = vpop.f32.mrb[0].mxu0
        %v458 = vadd.f32 %v377, %v457
        %v459 = vpop.f32.mrb[0].mxu0
        %460 = vdwg.mxu0
        %461 = vrot.lane.b32.xlu0 %v273, 108
        %v462 = vpop.permute.xlu0 %461
        %463 = vrot.lane.b32.xlu0 %v274, 108
        %v464 = vpop.permute.xlu0 %463
        %465 = vrot.lane.b32.xlu0 %v269, 126
        %v466 = vpop.permute.xlu0 %465
        %467 = vrot.lane.b32.xlu0 %v271, 126
        %v468 = vpop.permute.xlu0 %467
        %469 = vrot.lane.b32.xlu0 %v270, 126
        %v470 = vpop.permute.xlu0 %469
        %471 = vrot.lane.b32.xlu0 %v272, 126
        %v472 = vpop.permute.xlu0 %471
        %vm473 = vcmask 1031168
        %v474 = vsel %vm473, %v466, %v468
        %v475 = vsel %vm473, %v470, %v472
        %v477 = vsel %vm297, %v462, 0
        %v479 = vsel %vm297, %v464, 0
        %v481 = vsel %vm302, %v475, 0
        %483 = vmatprep.subr.mxu0 0.0
        %484 = vmatpush1.msra.mxu0 %v474
        %485 = vmatprep.subr.mxu0 0.0
        %486 = vmatpush1.msra.mxu0 %v481
        %487 = vmatprep.subr.mxu0 0.0
        %488 = vmatpush1.msra.mxu0 0.0
        %489 = vmatprep.subr.mxu0 0.0
        %490 = vmatpush1.msra.mxu0 0.0
        %491 = vmatprep.subr.mxu0 0.0
        %492 = vmatpush1.msra.mxu0 0.0
        %493 = vmatprep.subr.mxu0 0.0
        %494 = vmatpush1.msra.mxu0 0.0
        %495 = vmatprep.subr.mxu0 0.0
        %496 = vmatpush1.msra.mxu0 0.0
        %497 = vmatprep.subr.mxu0 0.0
        %498 = vmatpush1.msra.mxu0 0.0
        %499 = vmatprep.subr.mxu0 0.0
        %500 = vmatpush1.msra.mxu0 0.0
        %501 = vmatprep.subr.mxu0 0.0
        %502 = vmatpush1.msra.mxu0 0.0
        %503 = vmatprep.subr.mxu0 0.0
        %504 = vmatpush1.msra.mxu0 0.0
        %505 = vmatprep.subr.mxu0 0.0
        %506 = vmatpush1.msra.mxu0 0.0
        %507 = vmatprep.subr.mxu0 0.0
        %508 = vmatpush1.msra.mxu0 0.0
        %509 = vmatprep.subr.mxu0 0.0
        %510 = vmatpush1.msra.mxu0 0.0
        %511 = vmatprep.subr.mxu0 0.0
        %512 = vmatpush1.msra.mxu0 0.0
        %513 = vmatprep.subr.mxu0 0.0
        %514 = vmatpush1.msra.mxu0 0.0
        %515 = vmatprep.subr.mxu0 0.0
        %516 = vmatpush1.msra.mxu0 0.0
        %517 = vmatprep.subr.mxu0 0.0
        %518 = vmatpush1.msra.mxu0 0.0
        %519 = vmatprep.subr.mxu0 0.0
        %520 = vmatpush1.msra.mxu0 0.0
        %521 = vmatprep.subr.mxu0 0.0
        %522 = vmatpush1.msra.mxu0 0.0
        %523 = vmatprep.subr.mxu0 0.0
        %524 = vmatpush1.msra.mxu0 0.0
        %525 = vmatprep.subr.mxu0 0.0
        %526 = vmatpush1.msra.mxu0 0.0
        %527 = vmatprep.subr.mxu0 0.0
        %528 = vmatpush1.msra.mxu0 0.0
        %529 = vmatprep.subr.mxu0 0.0
        %530 = vmatpush1.msra.mxu0 0.0
        %531 = vmatprep.subr.mxu0 0.0
        %532 = vmatpush1.msra.mxu0 0.0
        %533 = vmatprep.subr.mxu0 0.0
        %534 = vmatpush1.msra.mxu0 0.0
        %535 = vmatprep.subr.mxu0 0.0
        %536 = vmatpush1.msra.mxu0 0.0
        %537 = vmatprep.subr.mxu0 0.0
        %538 = vmatpush1.msra.mxu0 0.0
        %539 = vmatprep.subr.mxu0 0.0
        %540 = vmatpush1.msra.mxu0 0.0
        %541 = vmatprep.subr.mxu0 0.0
        %542 = vmatpush1.msra.mxu0 0.0
        %543 = vmatprep.subr.mxu0 0.0
        %544 = vmatpush1.msra.mxu0 0.0
        %545 = vmatprep.subr.mxu0 0.0
        %546 = vmatpush1.msra.mxu0 0.0
        %547 = vmatprep.mubr.f32.mxu0 0.0
        %548 = vmatmul.mubr.f32.gmra.mrb[0].mxu0 %v477
        %v549 = vpop.f32.mrb[0].mxu0
        %v550 = vadd.f32 0.0, %v549
        %v551 = vpop.f32.mrb[0].mxu0
        %552 = vmatprep.mubr.f32.mxu0 0.0
        %553 = vmatmul.mubr.f32.gmra.mrb[0].mxu0 %v479
        %v554 = vpop.f32.mrb[0].mxu0
        %v555 = vadd.f32 0.0, %v554
        %v556 = vpop.f32.mrb[0].mxu0
        %557 = vdwg.mxu0
        %v558 = vadd.f32 %v453, %v550
        %v559 = vadd.f32 %v458, %v555
        %560 = vst [vmem:[%s268] sm:$0xff] %v558
        %561 = vst [vmem:[%s268 + $0x8] sm:$0x7] %v559
        %p562 = scmp.lt.s32.totalorder %s18, 1
        %s563 = scalar_select %p562, %s18, 1
        %p564 = scmp.lt.s32.totalorder %s19, 0
        %s565 = scalar_select %p564, %s19, 0
        %s566 = smul.addr %s565, 2
        %s567 = smul.addr %s563, 2
        %s568 = sadd.s32 %s566, %s567
        %s569 = smul.addr %s568, 8
        %s570 = scalar_lea.vmem %s3, %s569
        // Predicated region
        $region71: #{run.1} parent=65 // pred_check
          %p571 = pneg %p123
        $region72: #{run.1} parent=65 // pred_check_branch
          %573 = sbr.rel (%p571) target = $region74
        $region73: #{run.1} parent=65 // pred_region
          _
        $region74: #{run.1} parent=65 // pred_fallthru
          _
      $region66: #{run.1} parent=5 // pred_fallthru
        _
      %p574 = scmp.le.s32.totalorder 2, %s9
      // Predicated region
      $region75: #{run.1} parent=5 // pred_check
        %p575 = pneg %p574
      $region76: #{run.1} parent=5 // pred_check_branch
        %577 = sbr.rel (%p575) target = $region78
      $region77: #{run.1} parent=5 // pred_region
        %s578 = ssub.s32 %s9, 2
        // Predicated region
        $region79: #{run.1} parent=77 // pred_check
          %p579 = pneg %p129
        $region80: #{run.1} parent=77 // pred_check_branch
          %581 = sbr.rel (%p579) target = $region82
        $region81: #{run.1} parent=77 // pred_region
          %p582 = scmp.lt.s32.totalorder %s20, 1
          %s583 = scalar_select %p582, %s20, 1
          %p584 = scmp.lt.s32.totalorder %s21, 0
          %s585 = scalar_select %p584, %s21, 0
          %s586 = smul.addr %s585, 2
          %s587 = smul.addr %s583, 2
          %s588 = sadd.s32 %s586, %s587
          %s589 = smul.addr %s588, 8
          %s590 = scalar_lea.vmem %s3, %s589
        $region82: #{run.1} parent=77 // pred_fallthru
          _
      $region78: #{run.1} parent=5 // pred_fallthru
        _
    $region6: #{run.1} parent=1 // loop_footer
      %s13 = sadd.s32 1, %s9
    $region7: #{run.1} parent=1 // loop_footer_branch
      %8 = sbr.rel target = $region3
    $region8: #{run.1} parent=1 // loop_exit
      _

</llo_original>
